<compile_context>
chip_gen: v7x
topology: tpu7x:2x2x1
jax: 0.10.0
libtpu: 0.0.40
codegen_flags: <defaults>
</compile_context>

<pallas_src>
import functools
import math

import jax
import jax.numpy as jnp
from jax.experimental import pallas as pl
from jax.experimental.pallas import tpu as pltpu

_HIDDEN = 128      # hidden width (== lane width, keeps the slab layout trivial)
_LANE = 128
# Packed parameter slab row layout (all sections 8-row aligned):
#   rows [0, 8)              : w1   (only the first `input_size` rows are nonzero)
#   rows [8, 16)             : b1   (row 8)
#   rows [16, 16 + HIDDEN)   : w2   (zero-padded from n_actions to 128 columns)
#   rows [16+HIDDEN, +8)     : b2   (row 16 + HIDDEN, zero-padded columns)
_W1_OFF = 0
_B1_OFF = 8
_W2_OFF = 16
_B2_OFF = 16 + _HIDDEN
_SLAB_ROWS = _B2_OFF + 8   # 152
_MAX_BLOCK_ROWS = 4096     # cap per-block rows for very large rollout batches


def _round_up(x, m):
    return ((x + m - 1) // m) * m


@functools.lru_cache(maxsize=None)
def _tensorcores_per_chip():
    """Best-effort TensorCores per chip (v7x / v4 / v5p: 2, v5e / v6e / v2 / v3: 1)."""
    try:
        info = pltpu.get_tpu_info()
        for name in ("num_cores", "cores_per_chip", "num_tensorcores", "core_count"):
            v = getattr(info, name, None)
            if isinstance(v, int) and v > 0:
                return v
    except Exception:
        pass
    try:
        kind = jax.devices()[0].device_kind.lower()
    except Exception:
        return 1
    # Single-TensorCore chips.
    if any(tag in kind for tag in ("v2", "v3", "lite", "v5e", "v6e")):
        return 1
    # v4 / v5p (megacore) and v7x expose 2 TensorCores worth of parallel grid.
    return 2


def pgn_kernel(x_ref, p_ref, o_ref, *, in_cols, n_actions):
    x = x_ref[...]                                   # (bb, in_cols)
    w1 = p_ref[_W1_OFF:_W1_OFF + in_cols, :]         # (in_cols, 128)
    b1 = p_ref[_B1_OFF:_B1_OFF + 1, :]               # (1, 128)
    w2 = p_ref[_W2_OFF:_W2_OFF + _HIDDEN, :]         # (128, 128)  (cols zero-padded)
    b2 = p_ref[_B2_OFF:_B2_OFF + 1, :]               # (1, 128)    (cols zero-padded)

    # Hidden layer: (bb, in) @ (in, 128) + bias -> ReLU
    h = jnp.dot(x, w1, preferred_element_type=jnp.float32) + b1
    h = jnp.maximum(h, 0.0)
    # Output layer.  Only the real logits leave the kernel: (bb, n_actions)
    # store — no padded 128-lane HBM writeback, no wrapper-side slice.
    o = jnp.dot(h, w2, preferred_element_type=jnp.float32) + b2
    o_ref[...] = o[:, :n_actions].astype(o_ref.dtype)


def pack_pgn_params(w1, b1, w2, b2):
    """Pack all four parameters into a single (152, 128) f32 slab (do this ONCE)."""
    input_size, hidden = w1.shape
    n_actions = w2.shape[1]
    assert hidden == _HIDDEN and w2.shape[0] == _HIDDEN
    assert input_size <= 8 and n_actions <= _LANE
    slab = jnp.zeros((_SLAB_ROWS, _LANE), jnp.float32)
    slab = slab.at[_W1_OFF:_W1_OFF + input_size, :hidden].set(w1)
    slab = slab.at[_B1_OFF, :hidden].set(b1)
    slab = slab.at[_W2_OFF:_W2_OFF + hidden, :n_actions].set(w2)
    slab = slab.at[_B2_OFF, :n_actions].set(b2)
    return slab


def pgn_forward(x, packed_params, *, n_actions, num_cores=None):
    """Fused MLP forward on a batch of observations.

    x: (batch, in_cols) f32 with in_cols <= 8.  Passing observations pre-padded
       with zero columns to in_cols == 8 gives fully (8,128)-aligned operands
       with no per-call pad; the zero rows of the slab make it identical math.
    packed_params: (152, 128) slab from pack_pgn_params.
    Returns (batch, n_actions) logits.
    """
    batch, in_cols = x.shape
    assert in_cols <= 8, "observation width must be <= 8 (W1 slab section)"
    assert n_actions <= packed_params.shape[1], "n_actions exceeds slab lane width"
    assert packed_params.shape == (_SLAB_ROWS, _LANE)

    if num_cores is None:
        num_cores = _tensorcores_per_chip()

    # Block sizing: one block per TensorCore (so v7x never idles a core), capped
    # at _MAX_BLOCK_ROWS rows for huge batches, always a multiple of 8 rows.
    batch8 = _round_up(max(batch, 1), 8)
    n_blocks = max(num_cores, pl.cdiv(batch8, _MAX_BLOCK_ROWS))
    bb = _round_up(pl.cdiv(batch8, n_blocks), 8)
    padded_batch = _round_up(batch, bb)

    if padded_batch != batch:
        # Ragged fallback only: one fused pad launch; padded rows produce
        # garbage logits that are sliced off below and never consumed.
        x = jnp.pad(x, ((0, padded_batch - batch), (0, 0)))

    grid = (padded_batch // bb,)
    kernel = functools.partial(pgn_kernel, in_cols=in_cols, n_actions=n_actions)

    flops = 2 * padded_batch * (in_cols * _HIDDEN + _HIDDEN * _LANE)
    bytes_accessed = 4 * (padded_batch * in_cols          # x
                          + packed_params.size            # param slab (once)
                          + padded_batch * n_actions)     # logits only

    out = pl.pallas_call(
        kernel,
        out_shape=jax.ShapeDtypeStruct((padded_batch, n_actions), jnp.float32),
        grid=grid,
        in_specs=[
            pl.BlockSpec((bb, in_cols), lambda i: (i, 0)),       # x tile
            # Grid-invariant parameter slab: single small DMA per call.
            # (Could also be marked pipeline_mode=pl.Buffered(1) — minor.)
            pl.BlockSpec((_SLAB_ROWS, _LANE), lambda i: (0, 0)),
        ],
        out_specs=pl.BlockSpec((bb, n_actions), lambda i: (i, 0)),
        compiler_params=pltpu.CompilerParams(
            dimension_semantics=("parallel",)),
        cost_estimate=pl.CostEstimate(
            flops=flops, transcendentals=0, bytes_accessed=bytes_accessed),
    )(x, packed_params)

    if padded_batch != batch:
        out = out[:batch]
    return out


def init_pgn_params(key, input_size, n_actions, hidden=_HIDDEN):
    """PyTorch nn.Linear-style init U(-1/sqrt(fan_in), +1/sqrt(fan_in)).

    Weights are stored transposed vs. PyTorch, i.e. shape (in, out), so the
    kernel computes y = x @ W + b (same math as x @ W_pt.T + b).
    """
    k1, k2, k3, k4 = jax.random.split(key, 4)
    bound1 = 1.0 / math.sqrt(input_size)
    bound2 = 1.0 / math.sqrt(hidden)
    w1 = jax.random.uniform(k1, (input_size, hidden), jnp.float32, -bound1, bound1)
    b1 = jax.random.uniform(k2, (hidden,), jnp.float32, -bound1, bound1)
    w2 = jax.random.uniform(k3, (hidden, n_actions), jnp.float32, -bound2, bound2)
    b2 = jax.random.uniform(k4, (n_actions,), jnp.float32, -bound2, bound2)
    return w1, b1, w2, b2


if __name__ == "__main__":
    # CartPole-v0: observation size 4, 2 actions.  Batch many observations per
    # call (vectorized envs / whole rollout) to amortize launch overhead.
    input_size = 4
    n_actions = 2
    batch = 512

    key = jax.random.PRNGKey(0)
    kx, kp = jax.random.split(key)
    x = jax.random.normal(kx, (batch, input_size), dtype=jnp.float32)
    w1, b1, w2, b2 = init_pgn_params(kp, input_size, n_actions)
    packed = pack_pgn_params(w1, b1, w2, b2)   # packed ONCE, reused every step

    # Plain-JAX reference of the same math.
    ref = jnp.maximum(x @ w1 + b1, 0.0) @ w2 + b2

    # 1) Main path: raw (batch, 4) observations, multiple-of-8 batch -> no pad,
    #    no output slice, grid sized per TensorCore count.
    out = pgn_forward(x, packed, n_actions=n_actions)
    out = jax.block_until_ready(out)
    assert out.shape == (batch, n_actions)
    assert jnp.allclose(out, ref, atol=2e-5, rtol=2e-5)

    # 2) Aligned fast path: observations pre-padded to 8 feature columns
    #    (zero cols), giving fully (8,128)-aligned MXU operands.
    x8 = jnp.pad(x, ((0, 0), (0, 8 - input_size)))
    out8 = jax.block_until_ready(pgn_forward(x8, packed, n_actions=n_actions))
    assert jnp.allclose(out8, ref, atol=2e-5, rtol=2e-5)

    # 3) Ragged-batch fallback (pad + slice) still correct.
    out_r = jax.block_until_ready(pgn_forward(x[:37], packed, n_actions=n_actions))
    assert out_r.shape == (37, n_actions)
    assert jnp.allclose(out_r, ref[:37], atol=2e-5, rtol=2e-5)

    print("KERNEL_OK")
</pallas_src>

<mosaic_0001>
module attributes {stable_mosaic.version = 11 : i64} {
  func.func @pgn_kernel(%arg0: i32, %arg1: memref<256x4xf32, #tpu.memory_space<vmem>>, %arg2: memref<152x128xf32, #tpu.memory_space<vmem>>, %arg3: memref<256x2xf32, #tpu.memory_space<vmem>>) attributes {dimension_semantics = [#tpu.dimension_semantics<parallel>], iteration_bounds = array<i64: 2>, scalar_prefetch = 0 : i64, scratch_operands = 0 : i64, tpu.core_type = #tpu.core_type<tc>, window_params = [{transform_indices = @transform_0, window_bounds = array<i64: 256, 4>}, {pipeline_mode = #tpu.pipeline_mode<synchronous>, transform_indices = @transform_1, window_bounds = array<i64: 152, 128>}, {transform_indices = @transform_2, window_bounds = array<i64: 256, 2>}]} {
    %c0 = arith.constant 0 : index
    %c0_0 = arith.constant 0 : index
    %0 = vector.load %arg1[%c0, %c0_0] : memref<256x4xf32, #tpu.memory_space<vmem>>, vector<256x4xf32>
    %c0_1 = arith.constant 0 : index
    %c0_2 = arith.constant 0 : index
    %1 = vector.load %arg2[%c0_1, %c0_2] : memref<152x128xf32, #tpu.memory_space<vmem>>, vector<4x128xf32>
    %c8 = arith.constant 8 : index
    %c0_3 = arith.constant 0 : index
    %2 = vector.load %arg2[%c8, %c0_3] : memref<152x128xf32, #tpu.memory_space<vmem>>, vector<1x128xf32>
    %c16 = arith.constant 16 : index
    %c0_4 = arith.constant 0 : index
    %3 = vector.load %arg2[%c16, %c0_4] : memref<152x128xf32, #tpu.memory_space<vmem>>, vector<128x128xf32>
    %c144 = arith.constant 144 : index
    %c0_5 = arith.constant 0 : index
    %4 = vector.load %arg2[%c144, %c0_5] : memref<152x128xf32, #tpu.memory_space<vmem>>, vector<1x128xf32>
    %cst = arith.constant dense<0.000000e+00> : vector<256x128xf32>
    %5 = tpu.matmul %0, %1, %cst {dimension_numbers = #tpu.dot_dimension_numbers<[1], [0], [0], [1], [0, 0, 1, 1], [], []>} : vector<256x4xf32>, vector<4x128xf32>, vector<256x128xf32> -> vector<256x128xf32>
    %6 = vector.broadcast %2 : vector<1x128xf32> to vector<256x128xf32>
    %7 = arith.addf %5, %6 : vector<256x128xf32>
    %cst_6 = arith.constant 0.000000e+00 : f32
    %8 = vector.broadcast %cst_6 : f32 to vector<256x128xf32>
    %9 = arith.maximumf %7, %8 : vector<256x128xf32>
    %cst_7 = arith.constant dense<0.000000e+00> : vector<256x128xf32>
    %10 = tpu.matmul %9, %3, %cst_7 {dimension_numbers = #tpu.dot_dimension_numbers<[1], [0], [0], [1], [0, 0, 1, 1], [], []>} : vector<256x128xf32>, vector<128x128xf32>, vector<256x128xf32> -> vector<256x128xf32>
    %11 = vector.broadcast %4 : vector<1x128xf32> to vector<256x128xf32>
    %12 = arith.addf %10, %11 : vector<256x128xf32>
    %13 = vector.extract_strided_slice %12 {offsets = [0, 0], sizes = [256, 2], strides = [1, 1]} : vector<256x128xf32> to vector<256x2xf32>
    %c0_8 = arith.constant 0 : index
    %c0_9 = arith.constant 0 : index
    %14 = vector.load %arg3[%c0_8, %c0_9] : memref<256x2xf32, #tpu.memory_space<vmem>>, vector<256x2xf32>
    tpu.vector_store %arg3[%c0_8, %c0_9], %13 {strides = array<i32>} : memref<256x2xf32, #tpu.memory_space<vmem>>, vector<256x2xf32>,
    return
  }
  func.func @transform_0(%arg0: i32) -> (i32, i32) {
    %c0_i32 = arith.constant 0 : i32
    %c0_i32_0 = arith.constant 0 : i32
    return %arg0, %c0_i32 : i32, i32
  }
  func.func @transform_1(%arg0: i32) -> (i32, i32) {
    %c0_i32 = arith.constant 0 : i32
    %c0_i32_0 = arith.constant 0 : i32
    %c0_i32_1 = arith.constant 0 : i32
    return %c0_i32, %c0_i32_0 : i32, i32
  }
  func.func @transform_2(%arg0: i32) -> (i32, i32) {
    %c0_i32 = arith.constant 0 : i32
    %c0_i32_0 = arith.constant 0 : i32
    return %arg0, %c0_i32 : i32, i32
  }
}

</mosaic_0001>

<llo_original>
// kernel: tpu_custom_call.1
$region0: #{tpu_custom_call.1}
  #allocation0 [shape = 'u32[]', space=smem, size = 0x4, offset = 0x4, fixed_abs, tag = 'smem constant byte address 0x4 - core index']
  #allocation1 [shape = 'u32[144,128]{1,0:T(1,128)}', space=vmem, size = 0x12000, scoped, tag = 'internal scratch']
  %s0 = inlined_call_operand.vmem [shape: f32[512,4], index: 0, kind: input, shape index: {}]
  %s1 = inlined_call_operand.vmem [shape: f32[152,128], index: 1, kind: input, shape index: {}]
  %s2 = inlined_call_operand.vmem [shape: f32[512,2], index: 2, kind: output, shape index: {}]
  %s3 = sld [smem:[#allocation0]]
  $region41: #{tpu_custom_call.1} parent=0
    _
  %s5 = ssub.s32 1, %s3
  %s6 = scalar_select 0, %s5, %s3
  loop: start=0, step=1, limit=4
  $region2: #{tpu_custom_call.1} parent=0 // loop_pre_header
    _
  $region3: #{tpu_custom_call.1} parent=0 // loop_header
    %s8 = sphi 0, %s12
    %p9 = scmp.ge.s32.totalorder %s8, 4
    %s18 = sphi 0, %s20
    %s21 = sphi 0, %s18
    %s22 = sphi 0, %s21
    %s38 = sphi 0, %s22
    %s42 = sphi 0, %s42
    %s44 = sphi 0, %s42
    %s45 = sphi 0, %s44
    %s59 = sphi 0, %s45
    %s65 = sphi 0, %s67
    %s68 = sphi 0, %s65
    %s69 = sphi 0, %s68
    %s85 = sphi 0, %s69
  $region4: #{tpu_custom_call.1} parent=0 // loop_header_branch
    %11 = sbr.rel (%p9) target = $region8
  $region5: #{tpu_custom_call.1} parent=0 // loop_body
    %s13 = ssub.s32 %s8, 1
    %s14 = ssub.s32 %s8, 2
    %s15 = sadd.s32 %s8, 1
    %s16 = ssub.s32 %s8, %s15
    %p17 = scmp.eq.s32.totalorder %s16, 0
    %s19 = sadd.s32 %s18, 1
    %s20 = scalar_select %p17, %s18, %s19
    %p23 = pneg %p17
    %p24 = scmp.eq.s32.totalorder %s8, 1
    %p25 = por %p23, %p24
    %p26 = scmp.ne.s32.totalorder %s18, %s21
    %p27 = scmp.eq.s32.totalorder %s8, 0
    %p28 = por %p26, %p27
    %p29 = scmp.ne.s32.totalorder %s18, %s21
    %p30 = scmp.eq.s32.totalorder %s13, 1
    %p31 = por %p29, %p30
    %p32 = scmp.ne.s32.totalorder %s21, %s22
    %p33 = scmp.eq.s32.totalorder %s13, 0
    %p34 = por %p32, %p33
    %p35 = scmp.ne.s32.totalorder %s21, %s22
    %p36 = scmp.eq.s32.totalorder %s14, 1
    %p37 = por %p35, %p36
    %p39 = scmp.ne.s32.totalorder %s22, %s38
    %p40 = scmp.eq.s32.totalorder %s14, 0
    %p41 = por %p39, %p40
    %s43 = sadd.s32 %s42, 1
    %p46 = scmp.eq.s32.totalorder %s8, 1
    %p47 = scmp.ne.s32.totalorder %s42, %s44
    %p48 = scmp.eq.s32.totalorder %s8, 0
    %p49 = por %p47, %p48
    %p50 = scmp.ne.s32.totalorder %s42, %s44
    %p51 = scmp.eq.s32.totalorder %s13, 1
    %p52 = por %p50, %p51
    %p53 = scmp.ne.s32.totalorder %s44, %s45
    %p54 = scmp.eq.s32.totalorder %s13, 0
    %p55 = por %p53, %p54
    %p56 = scmp.ne.s32.totalorder %s44, %s45
    %p57 = scmp.eq.s32.totalorder %s14, 1
    %p58 = por %p56, %p57
    %p60 = scmp.ne.s32.totalorder %s45, %s59
    %p61 = scmp.eq.s32.totalorder %s14, 0
    %p62 = por %p60, %p61
    %s63 = ssub.s32 %s8, %s15
    %p64 = scmp.eq.s32.totalorder %s63, 0
    %s66 = sadd.s32 %s65, 1
    %s67 = scalar_select %p64, %s65, %s66
    %p70 = pneg %p64
    %p71 = scmp.eq.s32.totalorder %s8, 1
    %p72 = por %p70, %p71
    %p73 = scmp.ne.s32.totalorder %s65, %s68
    %p74 = scmp.eq.s32.totalorder %s8, 0
    %p75 = por %p73, %p74
    %p76 = scmp.ne.s32.totalorder %s65, %s68
    %p77 = scmp.eq.s32.totalorder %s13, 1
    %p78 = por %p76, %p77
    %p79 = scmp.ne.s32.totalorder %s68, %s69
    %p80 = scmp.eq.s32.totalorder %s13, 0
    %p81 = por %p79, %p80
    %p82 = scmp.ne.s32.totalorder %s68, %s69
    %p83 = scmp.eq.s32.totalorder %s14, 1
    %p84 = por %p82, %p83
    %p86 = scmp.ne.s32.totalorder %s69, %s85
    %p87 = scmp.eq.s32.totalorder %s14, 0
    %p88 = por %p86, %p87
    %p89 = scmp.le.s32.totalorder 1, %s8
    %p90 = scmp.lt.s32.totalorder %s8, 3
    %p91 = pnand %p89, %p90
    %p92 = pneg %p91
    // Predicated region
    $region9: #{tpu_custom_call.1} parent=5 // pred_check
      _
    $region10: #{tpu_custom_call.1} parent=5 // pred_check_branch
      %94 = sbr.rel (%p91) target = $region12
    $region11: #{tpu_custom_call.1} parent=5 // pred_region
      %s95 = ssub.s32 %s8, 1
      // Predicated region
      $region13: #{tpu_custom_call.1} parent=11 // pred_check
        %p96 = pneg %p55
      $region14: #{tpu_custom_call.1} parent=11 // pred_check_branch
        %98 = sbr.rel (%p96) target = $region16
      $region15: #{tpu_custom_call.1} parent=11 // pred_region
        _
      $region16: #{tpu_custom_call.1} parent=11 // pred_fallthru
        _
    $region12: #{tpu_custom_call.1} parent=5 // pred_fallthru
      _
    %p99 = scmp.lt.s32.totalorder %s8, 2
    // Predicated region
    $region17: #{tpu_custom_call.1} parent=5 // pred_check
      %p100 = pneg %p99
    $region18: #{tpu_custom_call.1} parent=5 // pred_check_branch
      %102 = sbr.rel (%p100) target = $region20
    $region19: #{tpu_custom_call.1} parent=5 // pred_region
      // Predicated region
      $region21: #{tpu_custom_call.1} parent=19 // pred_check
        %p103 = pneg %p28
      $region22: #{tpu_custom_call.1} parent=19 // pred_check_branch
        %105 = sbr.rel (%p103) target = $region24
      $region23: #{tpu_custom_call.1} parent=19 // pred_region
        %s106 = smul.u32 32, %s8
        %p107 = scmp.lt.s32.totalorder %s106, 63
        %s108 = scalar_select %p107, %s106, 63
        %s109 = smul.addr %s108, 8
        %s110 = scalar_lea.vmem %s0, %s109
        %s111 = smul.u32 32, %s8
      $region24: #{tpu_custom_call.1} parent=19 // pred_fallthru
        _
    $region20: #{tpu_custom_call.1} parent=5 // pred_fallthru
      _
    %p112 = scmp.le.s32.totalorder 1, %s8
    %p113 = scmp.lt.s32.totalorder %s8, 3
    %p114 = pnand %p112, %p113
    %p115 = pneg %p114
    // Predicated region
    $region25: #{tpu_custom_call.1} parent=5 // pred_check
      _
    $region26: #{tpu_custom_call.1} parent=5 // pred_check_branch
      %117 = sbr.rel (%p114) target = $region28
    $region27: #{tpu_custom_call.1} parent=5 // pred_region
      %s118 = ssub.s32 %s8, 1
      %s119 = smul.u32 32, %s13
      %p120 = scmp.lt.s32.totalorder %s119, 63
      %s121 = scalar_select %p120, %s119, 63
      %s122 = smul.addr %s121, 8
      %s123 = scalar_lea.vmem %s0, %s122
      %p124 = pneg %p34
      %p125 = pneg %p31
      %p126 = pneg %p55
      %p127 = pneg %p52
      %p128 = pneg %p81
      %p129 = pneg %p78
      %s130 = smul.u32 32, %s13
      %p131 = scmp.lt.s32.totalorder %s130, 63
      %s132 = scalar_select %p131, %s130, 63
      %s133 = smul.addr %s132, 8
      %s134 = scalar_lea.vmem %s2, %s133
      %s135 = smul.u32 32, %s13
      %p136 = scmp.lt.s32.totalorder %s135, 63
      %s137 = scalar_select %p136, %s135, 63
      %s138 = smul.addr %s137, 8
      %s139 = scalar_lea.vmem %s0, %s138
      %s140 = smul.u32 32, %s13
      %s141 = smul.u32 32, %s13
      %p142 = scmp.lt.s32.totalorder %s141, 63
      %s143 = scalar_select %p142, %s141, 63
      %s144 = smul.addr %s143, 8
      %s145 = scalar_lea.vmem %s2, %s144
      %s146 = smul.u32 32, %s13
      %v147 = vld [vmem:[%s139] sm:$0xff]
      %v148 = vld [vmem:[%s139 + $0x8] sm:$0xff]
      %v149 = vld [vmem:[%s139 + $0x10] sm:$0xff]
      %v150 = vld [vmem:[%s139 + $0x18] sm:$0xff]
      %v151 = vld [vmem:[%s139 + $0x20] sm:$0xff]
      %v152 = vld [vmem:[%s139 + $0x28] sm:$0xff]
      %v153 = vld [vmem:[%s139 + $0x30] sm:$0xff]
      %v154 = vld [vmem:[%s139 + $0x38] sm:$0xff]
      %v155 = vld [vmem:[%s139 + $0x40] sm:$0xff]
      %v156 = vld [vmem:[%s139 + $0x48] sm:$0xff]
      %v157 = vld [vmem:[%s139 + $0x50] sm:$0xff]
      %v158 = vld [vmem:[%s139 + $0x58] sm:$0xff]
      %v159 = vld [vmem:[%s139 + $0x60] sm:$0xff]
      %v160 = vld [vmem:[%s139 + $0x68] sm:$0xff]
      %v161 = vld [vmem:[%s139 + $0x70] sm:$0xff]
      %v162 = vld [vmem:[%s139 + $0x78] sm:$0xff]
      %v163 = vld [vmem:[%s139 + $0x80] sm:$0xff]
      %v164 = vld [vmem:[%s139 + $0x88] sm:$0xff]
      %v165 = vld [vmem:[%s139 + $0x90] sm:$0xff]
      %v166 = vld [vmem:[%s139 + $0x98] sm:$0xff]
      %v167 = vld [vmem:[%s139 + $0xa0] sm:$0xff]
      %v168 = vld [vmem:[%s139 + $0xa8] sm:$0xff]
      %v169 = vld [vmem:[%s139 + $0xb0] sm:$0xff]
      %v170 = vld [vmem:[%s139 + $0xb8] sm:$0xff]
      %v171 = vld [vmem:[%s139 + $0xc0] sm:$0xff]
      %v172 = vld [vmem:[%s139 + $0xc8] sm:$0xff]
      %v173 = vld [vmem:[%s139 + $0xd0] sm:$0xff]
      %v174 = vld [vmem:[%s139 + $0xd8] sm:$0xff]
      %v175 = vld [vmem:[%s139 + $0xe0] sm:$0xff]
      %v176 = vld [vmem:[%s139 + $0xe8] sm:$0xff]
      %v177 = vld [vmem:[%s139 + $0xf0] sm:$0xff]
      %v178 = vld [vmem:[%s139 + $0xf8] sm:$0xff]
      %v179 = vld [vmem:[%s1] sm:$0xf]
      %v180 = vld [vmem:[%s1 + $0x8] sm:$0x1]
      %v181 = vld [vmem:[%s1 + $0x10] sm:$0xff]
      %v182 = vld [vmem:[%s1 + $0x18] sm:$0xff]
      %v183 = vld [vmem:[%s1 + $0x20] sm:$0xff]
      %v184 = vld [vmem:[%s1 + $0x28] sm:$0xff]
      %v185 = vld [vmem:[%s1 + $0x30] sm:$0xff]
      %v186 = vld [vmem:[%s1 + $0x38] sm:$0xff]
      %v187 = vld [vmem:[%s1 + $0x40] sm:$0xff]
      %v188 = vld [vmem:[%s1 + $0x48] sm:$0xff]
      %v189 = vld [vmem:[%s1 + $0x50] sm:$0xff]
      %v190 = vld [vmem:[%s1 + $0x58] sm:$0xff]
      %v191 = vld [vmem:[%s1 + $0x60] sm:$0xff]
      %v192 = vld [vmem:[%s1 + $0x68] sm:$0xff]
      %v193 = vld [vmem:[%s1 + $0x70] sm:$0xff]
      %v194 = vld [vmem:[%s1 + $0x78] sm:$0xff]
      %v195 = vld [vmem:[%s1 + $0x80] sm:$0xff]
      %v196 = vld [vmem:[%s1 + $0x88] sm:$0xff]
      %v197 = vld [vmem:[%s1 + $0x90] sm:$0x1]
      %v198 = vlaneseq
      %v199 = vshrl.u32 %v198, 7
      %v200 = vsub.s32 0, %v199
      %v201 = vrot.slane %v180, %v200
      %vm202 = vcmask 31744
      %v204 = vsel %vm202, %v147, 0
      %v207 = vsel %vm202, %v148, 0
      %v210 = vsel %vm202, %v149, 0
      %v213 = vsel %vm202, %v150, 0
      %v216 = vsel %vm202, %v151, 0
      %v219 = vsel %vm202, %v152, 0
      %v222 = vsel %vm202, %v153, 0
      %v225 = vsel %vm202, %v154, 0
      %v228 = vsel %vm202, %v155, 0
      %v231 = vsel %vm202, %v156, 0
      %v234 = vsel %vm202, %v157, 0
      %v237 = vsel %vm202, %v158, 0
      %v240 = vsel %vm202, %v159, 0
      %v243 = vsel %vm202, %v160, 0
      %v246 = vsel %vm202, %v161, 0
      %v249 = vsel %vm202, %v162, 0
      %v252 = vsel %vm202, %v163, 0
      %v255 = vsel %vm202, %v164, 0
      %v258 = vsel %vm202, %v165, 0
      %v261 = vsel %vm202, %v166, 0
      %v264 = vsel %vm202, %v167, 0
      %v267 = vsel %vm202, %v168, 0
      %v270 = vsel %vm202, %v169, 0
      %v273 = vsel %vm202, %v170, 0
      %v276 = vsel %vm202, %v171, 0
      %v279 = vsel %vm202, %v172, 0
      %v282 = vsel %vm202, %v173, 0
      %v285 = vsel %vm202, %v174, 0
      %v288 = vsel %vm202, %v175, 0
      %v291 = vsel %vm202, %v176, 0
      %v294 = vsel %vm202, %v177, 0
      %v297 = vsel %vm202, %v178, 0
      %vm299 = vcmask 1043456
      %v301 = vsel %vm299, %v179, 0
      %303 = vmatprep.subr.mxu0 0.0
      %304 = vmatpush1.msra.mxu0 %v301
      %305 = vmatprep.subr.mxu0 0.0
      %306 = vmatpush1.msra.mxu0 0.0
      %307 = vmatprep.subr.mxu0 0.0
      %308 = vmatpush1.msra.mxu0 0.0
      %309 = vmatprep.subr.mxu0 0.0
      %310 = vmatpush1.msra.mxu0 0.0
      %311 = vmatprep.subr.mxu0 0.0
      %312 = vmatpush1.msra.mxu0 0.0
      %313 = vmatprep.subr.mxu0 0.0
      %314 = vmatpush1.msra.mxu0 0.0
      %315 = vmatprep.subr.mxu0 0.0
      %316 = vmatpush1.msra.mxu0 0.0
      %317 = vmatprep.subr.mxu0 0.0
      %318 = vmatpush1.msra.mxu0 0.0
      %319 = vmatprep.subr.mxu0 0.0
      %320 = vmatpush1.msra.mxu0 0.0
      %321 = vmatprep.subr.mxu0 0.0
      %322 = vmatpush1.msra.mxu0 0.0
      %323 = vmatprep.subr.mxu0 0.0
      %324 = vmatpush1.msra.mxu0 0.0
      %325 = vmatprep.subr.mxu0 0.0
      %326 = vmatpush1.msra.mxu0 0.0
      %327 = vmatprep.subr.mxu0 0.0
      %328 = vmatpush1.msra.mxu0 0.0
      %329 = vmatprep.subr.mxu0 0.0
      %330 = vmatpush1.msra.mxu0 0.0
      %331 = vmatprep.subr.mxu0 0.0
      %332 = vmatpush1.msra.mxu0 0.0
      %333 = vmatprep.subr.mxu0 0.0
      %334 = vmatpush1.msra.mxu0 0.0
      %335 = vmatprep.subr.mxu0 0.0
      %336 = vmatpush1.msra.mxu0 0.0
      %337 = vmatprep.subr.mxu0 0.0
      %338 = vmatpush1.msra.mxu0 0.0
      %339 = vmatprep.subr.mxu0 0.0
      %340 = vmatpush1.msra.mxu0 0.0
      %341 = vmatprep.subr.mxu0 0.0
      %342 = vmatpush1.msra.mxu0 0.0
      %343 = vmatprep.subr.mxu0 0.0
      %344 = vmatpush1.msra.mxu0 0.0
      %345 = vmatprep.subr.mxu0 0.0
      %346 = vmatpush1.msra.mxu0 0.0
      %347 = vmatprep.subr.mxu0 0.0
      %348 = vmatpush1.msra.mxu0 0.0
      %349 = vmatprep.subr.mxu0 0.0
      %350 = vmatpush1.msra.mxu0 0.0
      %351 = vmatprep.subr.mxu0 0.0
      %352 = vmatpush1.msra.mxu0 0.0
      %353 = vmatprep.subr.mxu0 0.0
      %354 = vmatpush1.msra.mxu0 0.0
      %355 = vmatprep.subr.mxu0 0.0
      %356 = vmatpush1.msra.mxu0 0.0
      %357 = vmatprep.subr.mxu0 0.0
      %358 = vmatpush1.msra.mxu0 0.0
      %359 = vmatprep.subr.mxu0 0.0
      %360 = vmatpush1.msra.mxu0 0.0
      %361 = vmatprep.subr.mxu0 0.0
      %362 = vmatpush1.msra.mxu0 0.0
      %363 = vmatprep.subr.mxu0 0.0
      %364 = vmatpush1.msra.mxu0 0.0
      %365 = vmatprep.subr.mxu0 0.0
      %366 = vmatpush1.msra.mxu0 0.0
      %367 = vmatprep.mubr.f32.mxu0 0.0
      %368 = vmatmul.mubr.f32.gmra.mrb[0].mxu0 %v204
      %v369 = vpop.f32.mrb[0].mxu0
      %v370 = vadd.f32 %v201, %v369
      %v371 = vpop.f32.mrb[0].mxu0
      %372 = vmatprep.mubr.f32.mxu0 0.0
      %373 = vmatmul.mubr.f32.gmra.mrb[0].mxu0 %v207
      %v374 = vpop.f32.mrb[0].mxu0
      %v375 = vadd.f32 %v201, %v374
      %v376 = vpop.f32.mrb[0].mxu0
      %377 = vmatprep.mubr.f32.mxu0 0.0
      %378 = vmatmul.mubr.f32.gmra.mrb[0].mxu0 %v210
      %v379 = vpop.f32.mrb[0].mxu0
      %v380 = vadd.f32 %v201, %v379
      %v381 = vpop.f32.mrb[0].mxu0
      %382 = vmatprep.mubr.f32.mxu0 0.0
      %383 = vmatmul.mubr.f32.gmra.mrb[0].mxu0 %v213
      %v384 = vpop.f32.mrb[0].mxu0
      %v385 = vadd.f32 %v201, %v384
      %v386 = vpop.f32.mrb[0].mxu0
      %387 = vmatprep.mubr.f32.mxu0 0.0
      %388 = vmatmul.mubr.f32.gmra.mrb[0].mxu0 %v216
      %v389 = vpop.f32.mrb[0].mxu0
      %v390 = vadd.f32 %v201, %v389
      %v391 = vpop.f32.mrb[0].mxu0
      %392 = vmatprep.mubr.f32.mxu0 0.0
      %393 = vmatmul.mubr.f32.gmra.mrb[0].mxu0 %v219
      %v394 = vpop.f32.mrb[0].mxu0
      %v395 = vadd.f32 %v201, %v394
      %v396 = vpop.f32.mrb[0].mxu0
      %397 = vmatprep.mubr.f32.mxu0 0.0
      %398 = vmatmul.mubr.f32.gmra.mrb[0].mxu0 %v222
      %v399 = vpop.f32.mrb[0].mxu0
      %v400 = vadd.f32 %v201, %v399
      %v401 = vpop.f32.mrb[0].mxu0
      %402 = vmatprep.mubr.f32.mxu0 0.0
      %403 = vmatmul.mubr.f32.gmra.mrb[0].mxu0 %v225
      %v404 = vpop.f32.mrb[0].mxu0
      %v405 = vadd.f32 %v201, %v404
      %v406 = vpop.f32.mrb[0].mxu0
      %407 = vmatprep.mubr.f32.mxu0 0.0
      %408 = vmatmul.mubr.f32.gmra.mrb[0].mxu0 %v228
      %v409 = vpop.f32.mrb[0].mxu0
      %v410 = vadd.f32 %v201, %v409
      %v411 = vpop.f32.mrb[0].mxu0
      %412 = vmatprep.mubr.f32.mxu0 0.0
      %413 = vmatmul.mubr.f32.gmra.mrb[0].mxu0 %v231
      %v414 = vpop.f32.mrb[0].mxu0
      %v415 = vadd.f32 %v201, %v414
      %v416 = vpop.f32.mrb[0].mxu0
      %417 = vmatprep.mubr.f32.mxu0 0.0
      %418 = vmatmul.mubr.f32.gmra.mrb[0].mxu0 %v234
      %v419 = vpop.f32.mrb[0].mxu0
      %v420 = vadd.f32 %v201, %v419
      %v421 = vpop.f32.mrb[0].mxu0
      %422 = vmatprep.mubr.f32.mxu0 0.0
      %423 = vmatmul.mubr.f32.gmra.mrb[0].mxu0 %v237
      %v424 = vpop.f32.mrb[0].mxu0
      %v425 = vadd.f32 %v201, %v424
      %v426 = vpop.f32.mrb[0].mxu0
      %427 = vmatprep.mubr.f32.mxu0 0.0
      %428 = vmatmul.mubr.f32.gmra.mrb[0].mxu0 %v240
      %v429 = vpop.f32.mrb[0].mxu0
      %v430 = vadd.f32 %v201, %v429
      %v431 = vpop.f32.mrb[0].mxu0
      %432 = vmatprep.mubr.f32.mxu0 0.0
      %433 = vmatmul.mubr.f32.gmra.mrb[0].mxu0 %v243
      %v434 = vpop.f32.mrb[0].mxu0
      %v435 = vadd.f32 %v201, %v434
      %v436 = vpop.f32.mrb[0].mxu0
      %437 = vmatprep.mubr.f32.mxu0 0.0
      %438 = vmatmul.mubr.f32.gmra.mrb[0].mxu0 %v246
      %v439 = vpop.f32.mrb[0].mxu0
      %v440 = vadd.f32 %v201, %v439
      %v441 = vpop.f32.mrb[0].mxu0
      %442 = vmatprep.mubr.f32.mxu0 0.0
      %443 = vmatmul.mubr.f32.gmra.mrb[0].mxu0 %v249
      %v444 = vpop.f32.mrb[0].mxu0
      %v445 = vadd.f32 %v201, %v444
      %v446 = vpop.f32.mrb[0].mxu0
      %447 = vmatprep.mubr.f32.mxu0 0.0
      %448 = vmatmul.mubr.f32.gmra.mrb[0].mxu0 %v252
      %v449 = vpop.f32.mrb[0].mxu0
      %v450 = vadd.f32 %v201, %v449
      %v451 = vpop.f32.mrb[0].mxu0
      %452 = vmatprep.mubr.f32.mxu0 0.0
      %453 = vmatmul.mubr.f32.gmra.mrb[0].mxu0 %v255
      %v454 = vpop.f32.mrb[0].mxu0
      %v455 = vadd.f32 %v201, %v454
      %v456 = vpop.f32.mrb[0].mxu0
      %457 = vmatprep.mubr.f32.mxu0 0.0
      %458 = vmatmul.mubr.f32.gmra.mrb[0].mxu0 %v258
      %v459 = vpop.f32.mrb[0].mxu0
      %v460 = vadd.f32 %v201, %v459
      %v461 = vpop.f32.mrb[0].mxu0
      %462 = vmatprep.mubr.f32.mxu0 0.0
      %463 = vmatmul.mubr.f32.gmra.mrb[0].mxu0 %v261
      %v464 = vpop.f32.mrb[0].mxu0
      %v465 = vadd.f32 %v201, %v464
      %v466 = vpop.f32.mrb[0].mxu0
      %467 = vmatprep.mubr.f32.mxu0 0.0
      %468 = vmatmul.mubr.f32.gmra.mrb[0].mxu0 %v264
      %v469 = vpop.f32.mrb[0].mxu0
      %v470 = vadd.f32 %v201, %v469
      %v471 = vpop.f32.mrb[0].mxu0
      %472 = vmatprep.mubr.f32.mxu0 0.0
      %473 = vmatmul.mubr.f32.gmra.mrb[0].mxu0 %v267
      %v474 = vpop.f32.mrb[0].mxu0
      %v475 = vadd.f32 %v201, %v474
      %v476 = vpop.f32.mrb[0].mxu0
      %477 = vmatprep.mubr.f32.mxu0 0.0
      %478 = vmatmul.mubr.f32.gmra.mrb[0].mxu0 %v270
      %v479 = vpop.f32.mrb[0].mxu0
      %v480 = vadd.f32 %v201, %v479
      %v481 = vpop.f32.mrb[0].mxu0
      %482 = vmatprep.mubr.f32.mxu0 0.0
      %483 = vmatmul.mubr.f32.gmra.mrb[0].mxu0 %v273
      %v484 = vpop.f32.mrb[0].mxu0
      %v485 = vadd.f32 %v201, %v484
      %v486 = vpop.f32.mrb[0].mxu0
      %487 = vmatprep.mubr.f32.mxu0 0.0
      %488 = vmatmul.mubr.f32.gmra.mrb[0].mxu0 %v276
      %v489 = vpop.f32.mrb[0].mxu0
      %v490 = vadd.f32 %v201, %v489
      %v491 = vpop.f32.mrb[0].mxu0
      %492 = vmatprep.mubr.f32.mxu0 0.0
      %493 = vmatmul.mubr.f32.gmra.mrb[0].mxu0 %v279
      %v494 = vpop.f32.mrb[0].mxu0
      %v495 = vadd.f32 %v201, %v494
      %v496 = vpop.f32.mrb[0].mxu0
      %497 = vmatprep.mubr.f32.mxu0 0.0
      %498 = vmatmul.mubr.f32.gmra.mrb[0].mxu0 %v282
      %v499 = vpop.f32.mrb[0].mxu0
      %v500 = vadd.f32 %v201, %v499
      %v501 = vpop.f32.mrb[0].mxu0
      %502 = vmatprep.mubr.f32.mxu0 0.0
      %503 = vmatmul.mubr.f32.gmra.mrb[0].mxu0 %v285
      %v504 = vpop.f32.mrb[0].mxu0
      %v505 = vadd.f32 %v201, %v504
      %v506 = vpop.f32.mrb[0].mxu0
      %507 = vmatprep.mubr.f32.mxu0 0.0
      %508 = vmatmul.mubr.f32.gmra.mrb[0].mxu0 %v288
      %v509 = vpop.f32.mrb[0].mxu0
      %v510 = vadd.f32 %v201, %v509
      %v511 = vpop.f32.mrb[0].mxu0
      %512 = vmatprep.mubr.f32.mxu0 0.0
      %513 = vmatmul.mubr.f32.gmra.mrb[0].mxu0 %v291
      %v514 = vpop.f32.mrb[0].mxu0
      %v515 = vadd.f32 %v201, %v514
      %v516 = vpop.f32.mrb[0].mxu0
      %517 = vmatprep.mubr.f32.mxu0 0.0
      %518 = vmatmul.mubr.f32.gmra.mrb[0].mxu0 %v294
      %v519 = vpop.f32.mrb[0].mxu0
      %v520 = vadd.f32 %v201, %v519
      %v521 = vpop.f32.mrb[0].mxu0
      %522 = vmatprep.mubr.f32.mxu0 0.0
      %523 = vmatmul.mubr.f32.gmra.mrb[0].mxu0 %v297
      %v524 = vpop.f32.mrb[0].mxu0
      %v525 = vadd.f32 %v201, %v524
      %v526 = vpop.f32.mrb[0].mxu0
      %527 = vdwg.mxu0
      %v528 = vmax.f32 %v370, 0.0
      %v529 = vmax.f32 %v375, 0.0
      %v530 = vmax.f32 %v380, 0.0
      %v531 = vmax.f32 %v385, 0.0
      %v532 = vmax.f32 %v390, 0.0
      %v533 = vmax.f32 %v395, 0.0
      %v534 = vmax.f32 %v400, 0.0
      %v535 = vmax.f32 %v405, 0.0
      %v536 = vmax.f32 %v410, 0.0
      %v537 = vmax.f32 %v415, 0.0
      %v538 = vmax.f32 %v420, 0.0
      %v539 = vmax.f32 %v425, 0.0
      %v540 = vmax.f32 %v430, 0.0
      %v541 = vmax.f32 %v435, 0.0
      %v542 = vmax.f32 %v440, 0.0
      %v543 = vmax.f32 %v445, 0.0
      %v544 = vmax.f32 %v450, 0.0
      %v545 = vmax.f32 %v455, 0.0
      %v546 = vmax.f32 %v460, 0.0
      %v547 = vmax.f32 %v465, 0.0
      %v548 = vmax.f32 %v470, 0.0
      %v549 = vmax.f32 %v475, 0.0
      %v550 = vmax.f32 %v480, 0.0
      %v551 = vmax.f32 %v485, 0.0
      %v552 = vmax.f32 %v490, 0.0
      %v553 = vmax.f32 %v495, 0.0
      %v554 = vmax.f32 %v500, 0.0
      %v555 = vmax.f32 %v505, 0.0
      %v556 = vmax.f32 %v510, 0.0
      %v557 = vmax.f32 %v515, 0.0
      %v558 = vmax.f32 %v520, 0.0
      %v559 = vmax.f32 %v525, 0.0
      %v560 = vlaneseq
      %v561 = vshrl.u32 %v560, 7
      %v562 = vsub.s32 0, %v561
      %v563 = vrot.slane %v197, %v562
      %564 = vmatprep.subr.mxu0 0.0
      %565 = vmatpush1.msra.mxu0 %v181
      %566 = vmatprep.subr.mxu0 0.0
      %567 = vmatpush1.msra.mxu0 %v182
      %568 = vmatprep.subr.mxu0 0.0
      %569 = vmatpush1.msra.mxu0 %v183
      %570 = vmatprep.subr.mxu0 0.0
      %571 = vmatpush1.msra.mxu0 %v184
      %572 = vmatprep.subr.mxu0 0.0
      %573 = vmatpush1.msra.mxu0 %v185
      %574 = vmatprep.subr.mxu0 0.0
      %575 = vmatpush1.msra.mxu0 %v186
      %576 = vmatprep.subr.mxu0 0.0
      %577 = vmatpush1.msra.mxu0 %v187
      %578 = vmatprep.subr.mxu0 0.0
      %579 = vmatpush1.msra.mxu0 %v188
      %580 = vmatprep.subr.mxu0 0.0
      %581 = vmatpush1.msra.mxu0 %v189
      %582 = vmatprep.subr.mxu0 0.0
      %583 = vmatpush1.msra.mxu0 %v190
      %584 = vmatprep.subr.mxu0 0.0
      %585 = vmatpush1.msra.mxu0 %v191
      %586 = vmatprep.subr.mxu0 0.0
      %587 = vmatpush1.msra.mxu0 %v192
      %588 = vmatprep.subr.mxu0 0.0
      %589 = vmatpush1.msra.mxu0 %v193
      %590 = vmatprep.subr.mxu0 0.0
      %591 = vmatpush1.msra.mxu0 %v194
      %592 = vmatprep.subr.mxu0 0.0
      %593 = vmatpush1.msra.mxu0 %v195
      %594 = vmatprep.subr.mxu0 0.0
      %595 = vmatpush1.msra.mxu0 %v196
      %596 = vmatprep.subr.mxu0 0.0
      %597 = vmatpush1.msra.mxu0 0.0
      %598 = vmatprep.subr.mxu0 0.0
      %599 = vmatpush1.msra.mxu0 0.0
      %600 = vmatprep.subr.mxu0 0.0
      %601 = vmatpush1.msra.mxu0 0.0
      %602 = vmatprep.subr.mxu0 0.0
      %603 = vmatpush1.msra.mxu0 0.0
      %604 = vmatprep.subr.mxu0 0.0
      %605 = vmatpush1.msra.mxu0 0.0
      %606 = vmatprep.subr.mxu0 0.0
      %607 = vmatpush1.msra.mxu0 0.0
      %608 = vmatprep.subr.mxu0 0.0
      %609 = vmatpush1.msra.mxu0 0.0
      %610 = vmatprep.subr.mxu0 0.0
      %611 = vmatpush1.msra.mxu0 0.0
      %612 = vmatprep.subr.mxu0 0.0
      %613 = vmatpush1.msra.mxu0 0.0
      %614 = vmatprep.subr.mxu0 0.0
      %615 = vmatpush1.msra.mxu0 0.0
      %616 = vmatprep.subr.mxu0 0.0
      %617 = vmatpush1.msra.mxu0 0.0
      %618 = vmatprep.subr.mxu0 0.0
      %619 = vmatpush1.msra.mxu0 0.0
      %620 = vmatprep.subr.mxu0 0.0
      %621 = vmatpush1.msra.mxu0 0.0
      %622 = vmatprep.subr.mxu0 0.0
      %623 = vmatpush1.msra.mxu0 0.0
      %624 = vmatprep.subr.mxu0 0.0
      %625 = vmatpush1.msra.mxu0 0.0
      %626 = vmatprep.subr.mxu0 0.0
      %627 = vmatpush1.msra.mxu0 0.0
      %628 = vmatprep.mubr.f32.mxu0 0.0
      %629 = vmatmul.mubr.f32.gmra.mrb[0].mxu0 %v528
      %v630 = vpop.f32.mrb[0].mxu0
      %v631 = vadd.f32 %v563, %v630
      %v632 = vpop.f32.mrb[0].mxu0
      %633 = vmatprep.mubr.f32.mxu0 0.0
      %634 = vmatmul.mubr.f32.gmra.mrb[0].mxu0 %v529
      %v635 = vpop.f32.mrb[0].mxu0
      %v636 = vadd.f32 %v563, %v635
      %v637 = vpop.f32.mrb[0].mxu0
      %638 = vmatprep.mubr.f32.mxu0 0.0
      %639 = vmatmul.mubr.f32.gmra.mrb[0].mxu0 %v530
      %v640 = vpop.f32.mrb[0].mxu0
      %v641 = vadd.f32 %v563, %v640
      %v642 = vpop.f32.mrb[0].mxu0
      %643 = vmatprep.mubr.f32.mxu0 0.0
      %644 = vmatmul.mubr.f32.gmra.mrb[0].mxu0 %v531
      %v645 = vpop.f32.mrb[0].mxu0
      %v646 = vadd.f32 %v563, %v645
      %v647 = vpop.f32.mrb[0].mxu0
      %648 = vmatprep.mubr.f32.mxu0 0.0
      %649 = vmatmul.mubr.f32.gmra.mrb[0].mxu0 %v532
      %v650 = vpop.f32.mrb[0].mxu0
      %v651 = vadd.f32 %v563, %v650
      %v652 = vpop.f32.mrb[0].mxu0
      %653 = vmatprep.mubr.f32.mxu0 0.0
      %654 = vmatmul.mubr.f32.gmra.mrb[0].mxu0 %v533
      %v655 = vpop.f32.mrb[0].mxu0
      %v656 = vadd.f32 %v563, %v655
      %v657 = vpop.f32.mrb[0].mxu0
      %658 = vmatprep.mubr.f32.mxu0 0.0
      %659 = vmatmul.mubr.f32.gmra.mrb[0].mxu0 %v534
      %v660 = vpop.f32.mrb[0].mxu0
      %v661 = vadd.f32 %v563, %v660
      %v662 = vpop.f32.mrb[0].mxu0
      %663 = vmatprep.mubr.f32.mxu0 0.0
      %664 = vmatmul.mubr.f32.gmra.mrb[0].mxu0 %v535
      %v665 = vpop.f32.mrb[0].mxu0
      %v666 = vadd.f32 %v563, %v665
      %v667 = vpop.f32.mrb[0].mxu0
      %668 = vmatprep.mubr.f32.mxu0 0.0
      %669 = vmatmul.mubr.f32.gmra.mrb[0].mxu0 %v536
      %v670 = vpop.f32.mrb[0].mxu0
      %v671 = vadd.f32 %v563, %v670
      %v672 = vpop.f32.mrb[0].mxu0
      %673 = vmatprep.mubr.f32.mxu0 0.0
      %674 = vmatmul.mubr.f32.gmra.mrb[0].mxu0 %v537
      %v675 = vpop.f32.mrb[0].mxu0
      %v676 = vadd.f32 %v563, %v675
      %v677 = vpop.f32.mrb[0].mxu0
      %678 = vmatprep.mubr.f32.mxu0 0.0
      %679 = vmatmul.mubr.f32.gmra.mrb[0].mxu0 %v538
      %v680 = vpop.f32.mrb[0].mxu0
      %v681 = vadd.f32 %v563, %v680
      %v682 = vpop.f32.mrb[0].mxu0
      %683 = vmatprep.mubr.f32.mxu0 0.0
      %684 = vmatmul.mubr.f32.gmra.mrb[0].mxu0 %v539
      %v685 = vpop.f32.mrb[0].mxu0
      %v686 = vadd.f32 %v563, %v685
      %v687 = vpop.f32.mrb[0].mxu0
      %688 = vmatprep.mubr.f32.mxu0 0.0
      %689 = vmatmul.mubr.f32.gmra.mrb[0].mxu0 %v540
      %v690 = vpop.f32.mrb[0].mxu0
      %v691 = vadd.f32 %v563, %v690
      %v692 = vpop.f32.mrb[0].mxu0
      %693 = vmatprep.mubr.f32.mxu0 0.0
      %694 = vmatmul.mubr.f32.gmra.mrb[0].mxu0 %v541
      %v695 = vpop.f32.mrb[0].mxu0
      %v696 = vadd.f32 %v563, %v695
      %v697 = vpop.f32.mrb[0].mxu0
      %698 = vmatprep.mubr.f32.mxu0 0.0
      %699 = vmatmul.mubr.f32.gmra.mrb[0].mxu0 %v542
      %v700 = vpop.f32.mrb[0].mxu0
      %v701 = vadd.f32 %v563, %v700
      %v702 = vpop.f32.mrb[0].mxu0
      %703 = vmatprep.mubr.f32.mxu0 0.0
      %704 = vmatmul.mubr.f32.gmra.mrb[0].mxu0 %v543
      %v705 = vpop.f32.mrb[0].mxu0
      %v706 = vadd.f32 %v563, %v705
      %v707 = vpop.f32.mrb[0].mxu0
      %708 = vmatprep.mubr.f32.mxu0 0.0
      %709 = vmatmul.mubr.f32.gmra.mrb[0].mxu0 %v544
      %v710 = vpop.f32.mrb[0].mxu0
      %v711 = vadd.f32 %v563, %v710
      %v712 = vpop.f32.mrb[0].mxu0
      %713 = vmatprep.mubr.f32.mxu0 0.0
      %714 = vmatmul.mubr.f32.gmra.mrb[0].mxu0 %v545
      %v715 = vpop.f32.mrb[0].mxu0
      %v716 = vadd.f32 %v563, %v715
      %v717 = vpop.f32.mrb[0].mxu0
      %718 = vmatprep.mubr.f32.mxu0 0.0
      %719 = vmatmul.mubr.f32.gmra.mrb[0].mxu0 %v546
      %v720 = vpop.f32.mrb[0].mxu0
      %v721 = vadd.f32 %v563, %v720
      %v722 = vpop.f32.mrb[0].mxu0
      %723 = vmatprep.mubr.f32.mxu0 0.0
      %724 = vmatmul.mubr.f32.gmra.mrb[0].mxu0 %v547
      %v725 = vpop.f32.mrb[0].mxu0
      %v726 = vadd.f32 %v563, %v725
      %v727 = vpop.f32.mrb[0].mxu0
      %728 = vmatprep.mubr.f32.mxu0 0.0
      %729 = vmatmul.mubr.f32.gmra.mrb[0].mxu0 %v548
      %v730 = vpop.f32.mrb[0].mxu0
      %v731 = vadd.f32 %v563, %v730
      %v732 = vpop.f32.mrb[0].mxu0
      %733 = vmatprep.mubr.f32.mxu0 0.0
      %734 = vmatmul.mubr.f32.gmra.mrb[0].mxu0 %v549
      %v735 = vpop.f32.mrb[0].mxu0
      %v736 = vadd.f32 %v563, %v735
      %v737 = vpop.f32.mrb[0].mxu0
      %738 = vmatprep.mubr.f32.mxu0 0.0
      %739 = vmatmul.mubr.f32.gmra.mrb[0].mxu0 %v550
      %v740 = vpop.f32.mrb[0].mxu0
      %v741 = vadd.f32 %v563, %v740
      %v742 = vpop.f32.mrb[0].mxu0
      %743 = vmatprep.mubr.f32.mxu0 0.0
      %744 = vmatmul.mubr.f32.gmra.mrb[0].mxu0 %v551
      %v745 = vpop.f32.mrb[0].mxu0
      %v746 = vadd.f32 %v563, %v745
      %v747 = vpop.f32.mrb[0].mxu0
      %748 = vmatprep.mubr.f32.mxu0 0.0
      %749 = vmatmul.mubr.f32.gmra.mrb[0].mxu0 %v552
      %v750 = vpop.f32.mrb[0].mxu0
      %v751 = vadd.f32 %v563, %v750
      %v752 = vpop.f32.mrb[0].mxu0
      %753 = vmatprep.mubr.f32.mxu0 0.0
      %754 = vmatmul.mubr.f32.gmra.mrb[0].mxu0 %v553
      %v755 = vpop.f32.mrb[0].mxu0
      %v756 = vadd.f32 %v563, %v755
      %v757 = vpop.f32.mrb[0].mxu0
      %758 = vmatprep.mubr.f32.mxu0 0.0
      %759 = vmatmul.mubr.f32.gmra.mrb[0].mxu0 %v554
      %v760 = vpop.f32.mrb[0].mxu0
      %v761 = vadd.f32 %v563, %v760
      %v762 = vpop.f32.mrb[0].mxu0
      %763 = vmatprep.mubr.f32.mxu0 0.0
      %764 = vmatmul.mubr.f32.gmra.mrb[0].mxu0 %v555
      %v765 = vpop.f32.mrb[0].mxu0
      %v766 = vadd.f32 %v563, %v765
      %v767 = vpop.f32.mrb[0].mxu0
      %768 = vmatprep.mubr.f32.mxu0 0.0
      %769 = vmatmul.mubr.f32.gmra.mrb[0].mxu0 %v556
      %v770 = vpop.f32.mrb[0].mxu0
      %v771 = vadd.f32 %v563, %v770
      %v772 = vpop.f32.mrb[0].mxu0
      %773 = vmatprep.mubr.f32.mxu0 0.0
      %774 = vmatmul.mubr.f32.gmra.mrb[0].mxu0 %v557
      %v775 = vpop.f32.mrb[0].mxu0
      %v776 = vadd.f32 %v563, %v775
      %v777 = vpop.f32.mrb[0].mxu0
      %778 = vmatprep.mubr.f32.mxu0 0.0
      %779 = vmatmul.mubr.f32.gmra.mrb[0].mxu0 %v558
      %v780 = vpop.f32.mrb[0].mxu0
      %v781 = vadd.f32 %v563, %v780
      %v782 = vpop.f32.mrb[0].mxu0
      %783 = vmatprep.mubr.f32.mxu0 0.0
      %784 = vmatmul.mubr.f32.gmra.mrb[0].mxu0 %v559
      %v785 = vpop.f32.mrb[0].mxu0
      %v786 = vadd.f32 %v563, %v785
      %v787 = vpop.f32.mrb[0].mxu0
      %788 = vdwg.mxu0
      %vm789 = vcmask 15360
      %790 = vst.msk [vmem:[%s145] sm:$0xff] %vm789, %v631
      %791 = vst.msk [vmem:[%s145 + $0x8] sm:$0xff] %vm789, %v636
      %792 = vst.msk [vmem:[%s145 + $0x10] sm:$0xff] %vm789, %v641
      %793 = vst.msk [vmem:[%s145 + $0x18] sm:$0xff] %vm789, %v646
      %794 = vst.msk [vmem:[%s145 + $0x20] sm:$0xff] %vm789, %v651
      %795 = vst.msk [vmem:[%s145 + $0x28] sm:$0xff] %vm789, %v656
      %796 = vst.msk [vmem:[%s145 + $0x30] sm:$0xff] %vm789, %v661
      %797 = vst.msk [vmem:[%s145 + $0x38] sm:$0xff] %vm789, %v666
      %798 = vst.msk [vmem:[%s145 + $0x40] sm:$0xff] %vm789, %v671
      %799 = vst.msk [vmem:[%s145 + $0x48] sm:$0xff] %vm789, %v676
      %800 = vst.msk [vmem:[%s145 + $0x50] sm:$0xff] %vm789, %v681
      %801 = vst.msk [vmem:[%s145 + $0x58] sm:$0xff] %vm789, %v686
      %802 = vst.msk [vmem:[%s145 + $0x60] sm:$0xff] %vm789, %v691
      %803 = vst.msk [vmem:[%s145 + $0x68] sm:$0xff] %vm789, %v696
      %804 = vst.msk [vmem:[%s145 + $0x70] sm:$0xff] %vm789, %v701
      %805 = vst.msk [vmem:[%s145 + $0x78] sm:$0xff] %vm789, %v706
      %806 = vst.msk [vmem:[%s145 + $0x80] sm:$0xff] %vm789, %v711
      %807 = vst.msk [vmem:[%s145 + $0x88] sm:$0xff] %vm789, %v716
      %808 = vst.msk [vmem:[%s145 + $0x90] sm:$0xff] %vm789, %v721
      %809 = vst.msk [vmem:[%s145 + $0x98] sm:$0xff] %vm789, %v726
      %810 = vst.msk [vmem:[%s145 + $0xa0] sm:$0xff] %vm789, %v731
      %811 = vst.msk [vmem:[%s145 + $0xa8] sm:$0xff] %vm789, %v736
      %812 = vst.msk [vmem:[%s145 + $0xb0] sm:$0xff] %vm789, %v741
      %813 = vst.msk [vmem:[%s145 + $0xb8] sm:$0xff] %vm789, %v746
      %814 = vst.msk [vmem:[%s145 + $0xc0] sm:$0xff] %vm789, %v751
      %815 = vst.msk [vmem:[%s145 + $0xc8] sm:$0xff] %vm789, %v756
      %816 = vst.msk [vmem:[%s145 + $0xd0] sm:$0xff] %vm789, %v761
      %817 = vst.msk [vmem:[%s145 + $0xd8] sm:$0xff] %vm789, %v766
      %818 = vst.msk [vmem:[%s145 + $0xe0] sm:$0xff] %vm789, %v771
      %819 = vst.msk [vmem:[%s145 + $0xe8] sm:$0xff] %vm789, %v776
      %820 = vst.msk [vmem:[%s145 + $0xf0] sm:$0xff] %vm789, %v781
      %821 = vst.msk [vmem:[%s145 + $0xf8] sm:$0xff] %vm789, %v786
      %s822 = smul.u32 32, %s13
      %p823 = scmp.lt.s32.totalorder %s822, 63
      %s824 = scalar_select %p823, %s822, 63
      %s825 = smul.addr %s824, 8
      %s826 = scalar_lea.vmem %s2, %s825
      // Predicated region
      $region29: #{tpu_custom_call.1} parent=27 // pred_check
        %p827 = pneg %p78
      $region30: #{tpu_custom_call.1} parent=27 // pred_check_branch
        %829 = sbr.rel (%p827) target = $region32
      $region31: #{tpu_custom_call.1} parent=27 // pred_region
        %s830 = smul.u32 32, %s13
      $region32: #{tpu_custom_call.1} parent=27 // pred_fallthru
        _
    $region28: #{tpu_custom_call.1} parent=5 // pred_fallthru
      _
    %p831 = scmp.le.s32.totalorder 2, %s8
    // Predicated region
    $region33: #{tpu_custom_call.1} parent=5 // pred_check
      %p832 = pneg %p831
    $region34: #{tpu_custom_call.1} parent=5 // pred_check_branch
      %834 = sbr.rel (%p832) target = $region36
    $region35: #{tpu_custom_call.1} parent=5 // pred_region
      %s835 = ssub.s32 %s8, 2
      // Predicated region
      $region37: #{tpu_custom_call.1} parent=35 // pred_check
        %p836 = pneg %p84
      $region38: #{tpu_custom_call.1} parent=35 // pred_check_branch
        %838 = sbr.rel (%p836) target = $region40
      $region39: #{tpu_custom_call.1} parent=35 // pred_region
        %s839 = smul.u32 32, %s14
        %p840 = scmp.lt.s32.totalorder %s839, 63
        %s841 = scalar_select %p840, %s839, 63
        %s842 = smul.addr %s841, 8
        %s843 = scalar_lea.vmem %s2, %s842
      $region40: #{tpu_custom_call.1} parent=35 // pred_fallthru
        _
    $region36: #{tpu_custom_call.1} parent=5 // pred_fallthru
      _
  $region6: #{tpu_custom_call.1} parent=0 // loop_footer
    %s12 = sadd.s32 1, %s8
  $region7: #{tpu_custom_call.1} parent=0 // loop_footer_branch
    %7 = sbr.rel target = $region3
  $region8: #{tpu_custom_call.1} parent=0 // loop_exit
    _

</llo_original>
